<compile_context>
chip_gen: v6e
topology: v6e:2x2x1
jax: 0.10.0
libtpu: 0.0.40
codegen_flags: <defaults>
</compile_context>

<pallas_src>
import jax
import jax.numpy as jnp
from jax.experimental import pallas as pl
from jax.experimental.pallas import tpu as pltpu


def _embed_kernel(x_ref, w_ref, b_ref, o_ref):
    # (tile, K) @ (K, d_out) on the MXU with f32 accumulation, then bias add.
    acc = jnp.dot(x_ref[...], w_ref[...], preferred_element_type=jnp.float32)
    o_ref[...] = (acc + b_ref[...]).astype(o_ref.dtype)


def data_embedding(x, x_mark, wv, bv, wt, bt, *, use_time_feat=True,
                   tile_rows=2048):
    """x: (B, L, c_in), x_mark: (B, L, d_inp).  Returns (B, L, d_model).

    Weights are stored pre-transposed (in, out) relative to nn.Linear.
    """
    B, L, c_in = x.shape
    d_model = wv.shape[1]
    N = B * L
    out_dtype = x.dtype

    # ---- Fuse value + temporal embeddings into a single matmul ------------
    if use_time_feat:
        d_inp = x_mark.shape[-1]
        x2 = jnp.concatenate(
            [x.reshape(N, c_in), x_mark.reshape(N, d_inp)], axis=-1)
        W = jnp.concatenate([wv, wt], axis=0)          # (c_in + d_inp, d_model)
        bias = bv + bt
        K = c_in + d_inp
    else:
        x2 = x.reshape(N, c_in)
        W = wv
        bias = bv
        K = c_in

    # ---- Lane-dense output folding for small d_model ----------------------
    # Fold G = 128 // d_model consecutive rows into the 128 lanes using a
    # block-diagonal weight.  Memory layout of the (N/G, 128) output equals
    # that of (N, d_model), so the final reshape is free.
    G = 1
    if d_model < 128 and 128 % d_model == 0 and N % (128 // d_model) == 0:
        G = 128 // d_model
    if G > 1:
        n_rows = N // G
        d_out = G * d_model                            # == 128
        K_eff = G * K
        x2 = x2.reshape(n_rows, K_eff)
        Wf = jnp.zeros((K_eff, d_out), dtype=W.dtype)
        for g in range(G):                             # static, trace-time
            Wf = Wf.at[g * K:(g + 1) * K, g * d_model:(g + 1) * d_model].set(W)
        W = Wf
        bias = jnp.tile(bias, G)                       # (128,)
    else:
        n_rows = N
        d_out = d_model
        K_eff = K

    bias2 = bias.reshape(1, d_out)

    # ---- Row tiling (no padding; Pallas masks the partial last block) -----
    if n_rows <= tile_rows:
        tile = n_rows                                  # full extent, grid of 1
        grid = (1,)
    else:
        tile = tile_rows                               # multiple of 8 (and 16)
        grid = (pl.cdiv(n_rows, tile),)

    itemsize = jnp.dtype(out_dtype).itemsize
    cost = pl.CostEstimate(
        flops=2 * n_rows * K_eff * d_out,
        transcendentals=0,
        bytes_accessed=itemsize * (n_rows * (K_eff + d_out)
                                   + (K_eff + 1) * d_out),
    )

    out = pl.pallas_call(
        _embed_kernel,
        out_shape=jax.ShapeDtypeStruct((n_rows, d_out), out_dtype),
        grid_spec=pl.GridSpec(
            grid=grid,
            in_specs=[
                pl.BlockSpec((tile, K_eff), lambda i: (i, 0)),
                # weights / bias: constant index_map -> VMEM-resident
                pl.BlockSpec((K_eff, d_out), lambda i: (0, 0)),
                pl.BlockSpec((1, d_out), lambda i: (0, 0)),
            ],
            out_specs=pl.BlockSpec((tile, d_out), lambda i: (i, 0)),
        ),
        compiler_params=pltpu.CompilerParams(
            dimension_semantics=("parallel",),
            vmem_limit_bytes=32 * 1024 * 1024,
        ),
        cost_estimate=cost,
    )(x2, W, bias2)

    return out.reshape(B, L, d_model)


if __name__ == "__main__":
    # Small shapes consistent with the module: freq='H' -> d_inp = 5
    B, L, c_in, d_model, d_inp = 2, 8, 4, 32, 5

    key = jax.random.PRNGKey(0)
    k_x, k_xm, k_wv, k_bv, k_wt, k_bt, k_x3, k_xm3 = jax.random.split(key, 8)

    x = jax.random.normal(k_x, (B, L, c_in), dtype=jnp.float32)
    x_mark = jax.random.normal(k_xm, (B, L, d_inp), dtype=jnp.float32)

    # PyTorch nn.Linear stores weight as (out, in) and computes x @ W.T + b;
    # here we store the already-transposed (in, out) matrices for the kernel.
    wv = jax.random.normal(k_wv, (c_in, d_model), dtype=jnp.float32) * 0.1
    bv = jax.random.normal(k_bv, (d_model,), dtype=jnp.float32) * 0.1
    wt = jax.random.normal(k_wt, (d_inp, d_model), dtype=jnp.float32) * 0.1
    bt = jax.random.normal(k_bt, (d_model,), dtype=jnp.float32) * 0.1

    # 1) use_time_feat=True path (lane-folded output, single grid step)
    out = data_embedding(x, x_mark, wv, bv, wt, bt, use_time_feat=True)
    out = jax.block_until_ready(out)
    ref = (x @ wv + bv) + (x_mark @ wt + bt)
    assert out.shape == (B, L, d_model)
    assert jnp.allclose(out, ref, atol=1e-5, rtol=1e-5)

    # 2) use_time_feat=False path (temporal matmul skipped entirely)
    out2 = data_embedding(x, x_mark, wv, bv, wt, bt, use_time_feat=False)
    out2 = jax.block_until_ready(out2)
    ref2 = x @ wv + bv
    assert out2.shape == (B, L, d_model)
    assert jnp.allclose(out2, ref2, atol=1e-5, rtol=1e-5)

    # 3) Non-divisible row count + multi-step grid with a partial last block
    #    (exercises the unfolded fallback and Pallas' implicit masking).
    B3, L3 = 2, 9                                       # N = 18, not % 4
    x3 = jax.random.normal(k_x3, (B3, L3, c_in), dtype=jnp.float32)
    xm3 = jax.random.normal(k_xm3, (B3, L3, d_inp), dtype=jnp.float32)
    out3 = data_embedding(x3, xm3, wv, bv, wt, bt, use_time_feat=True,
                          tile_rows=8)
    out3 = jax.block_until_ready(out3)
    ref3 = (x3 @ wv + bv) + (xm3 @ wt + bt)
    assert out3.shape == (B3, L3, d_model)
    assert jnp.allclose(out3, ref3, atol=1e-5, rtol=1e-5)

    print("KERNEL_OK")
</pallas_src>

<mosaic_0001>
module attributes {stable_mosaic.version = 11 : i64} {
  func.func @_embed_kernel(%arg0: i32, %arg1: memref<4x36xf32, #tpu.memory_space<vmem>>, %arg2: memref<36x128xf32, #tpu.memory_space<vmem>>, %arg3: memref<1x128xf32, #tpu.memory_space<vmem>>, %arg4: memref<4x128xf32, #tpu.memory_space<vmem>>) attributes {dimension_semantics = [#tpu.dimension_semantics<parallel>], iteration_bounds = array<i64: 1>, scalar_prefetch = 0 : i64, scratch_operands = 0 : i64, tpu.core_type = #tpu.core_type<tc>, window_params = [{transform_indices = @transform_0, window_bounds = array<i64: 4, 36>}, {pipeline_mode = #tpu.pipeline_mode<synchronous>, transform_indices = @transform_1, window_bounds = array<i64: 36, 128>}, {pipeline_mode = #tpu.pipeline_mode<synchronous>, transform_indices = @transform_2, window_bounds = array<i64: 1, 128>}, {transform_indices = @transform_3, window_bounds = array<i64: 4, 128>}]} {
    %c0 = arith.constant 0 : index
    %c0_0 = arith.constant 0 : index
    %0 = vector.load %arg1[%c0, %c0_0] : memref<4x36xf32, #tpu.memory_space<vmem>>, vector<4x36xf32>
    %c0_1 = arith.constant 0 : index
    %c0_2 = arith.constant 0 : index
    %1 = vector.load %arg2[%c0_1, %c0_2] : memref<36x128xf32, #tpu.memory_space<vmem>>, vector<36x128xf32>
    %cst = arith.constant dense<0.000000e+00> : vector<4x128xf32>
    %2 = tpu.matmul %0, %1, %cst {dimension_numbers = #tpu.dot_dimension_numbers<[1], [0], [0], [1], [0, 0, 1, 1], [], []>} : vector<4x36xf32>, vector<36x128xf32>, vector<4x128xf32> -> vector<4x128xf32>
    %c0_3 = arith.constant 0 : index
    %c0_4 = arith.constant 0 : index
    %3 = vector.load %arg3[%c0_3, %c0_4] : memref<1x128xf32, #tpu.memory_space<vmem>>, vector<1x128xf32>
    %4 = vector.broadcast %3 : vector<1x128xf32> to vector<4x128xf32>
    %5 = arith.addf %2, %4 : vector<4x128xf32>
    %c0_5 = arith.constant 0 : index
    %c0_6 = arith.constant 0 : index
    %6 = vector.load %arg4[%c0_5, %c0_6] : memref<4x128xf32, #tpu.memory_space<vmem>>, vector<4x128xf32>
    tpu.vector_store %arg4[%c0_5, %c0_6], %5 {strides = array<i32>} : memref<4x128xf32, #tpu.memory_space<vmem>>, vector<4x128xf32>,
    return
  }
  func.func @transform_0(%arg0: i32) -> (i32, i32) {
    %c0_i32 = arith.constant 0 : i32
    %c0_i32_0 = arith.constant 0 : i32
    return %arg0, %c0_i32 : i32, i32
  }
  func.func @transform_1(%arg0: i32) -> (i32, i32) {
    %c0_i32 = arith.constant 0 : i32
    %c0_i32_0 = arith.constant 0 : i32
    %c0_i32_1 = arith.constant 0 : i32
    return %c0_i32, %c0_i32_0 : i32, i32
  }
  func.func @transform_2(%arg0: i32) -> (i32, i32) {
    %c0_i32 = arith.constant 0 : i32
    %c0_i32_0 = arith.constant 0 : i32
    %c0_i32_1 = arith.constant 0 : i32
    return %c0_i32, %c0_i32_0 : i32, i32
  }
  func.func @transform_3(%arg0: i32) -> (i32, i32) {
    %c0_i32 = arith.constant 0 : i32
    %c0_i32_0 = arith.constant 0 : i32
    return %arg0, %c0_i32 : i32, i32
  }
}

</mosaic_0001>

<llo_original>
// kernel: tpu_custom_call.1
$region0: #{tpu_custom_call.1}
  #allocation0 [shape = 'u32[]', space=smem, size = 0x4, offset = 0x4, fixed_abs, tag = 'smem constant byte address 0x4 - core index']
  #allocation1 [shape = 'u32[144,128]{1,0:T(1,128)}', space=vmem, size = 0x12000, scoped, tag = 'internal scratch']
  %s0 = inlined_call_operand.hbm [shape: f32[4,36], index: 0, kind: input, shape index: {}]
  %s1 = inlined_call_operand.hbm [shape: f32[36,128], index: 1, kind: input, shape index: {}]
  %s2 = inlined_call_operand.vmem [shape: f32[1,128], index: 2, kind: input, shape index: {}]
  %s3 = inlined_call_operand.hbm [shape: f32[4,128], index: 3, kind: output, shape index: {}]
  %s4 = sld [smem:[#allocation0]]
  $region30: #{tpu_custom_call.1} parent=0
    _
  %s6 = ssub.s32 1, %s4
  %s7 = scalar_select 0, %s6, %s4
  $region1: #{tpu_custom_call.1} parent=0
    #allocation2 [shape = 'u8[2048]{0}', space=vmem, size = 0x800, scoped, tag = 'input window, operand 0, single buffered']
    #allocation3 [shape = 's32[1]{0}', space=sflag, size = 0x4, scoped, tag = 'scoped memory for tpu_custom_call.1']
    #allocation4 [shape = 's32[1]{0}', space=sflag, size = 0x4, scoped, tag = 'scoped memory for tpu_custom_call.1']
    #allocation5 [shape = 'u8[20480]{0}', space=vmem, size = 0x5000, scoped, tag = 'input window, operand 1, single buffered']
    #allocation6 [shape = 's32[1]{0}', space=sflag, size = 0x4, scoped, tag = 'scoped memory for tpu_custom_call.1']
    #allocation7 [shape = 'u8[2048]{0}', space=vmem, size = 0x800, scoped, tag = 'output window, operand 0, single buffered']
    %8 = vsyncpa [#allocation3], 0
    %9 = vsyncpa [#allocation6], 0
    %10 = vsyncpa [#allocation4], 0
    // Predicated region
    $region2: #{tpu_custom_call.1} parent=1 // pred_check
      _
    $region3: #{tpu_custom_call.1} parent=1 // pred_check_branch
      %12 = sbr.rel (0) target = $region5
    $region4: #{tpu_custom_call.1} parent=1 // pred_region
      %s14 = ssub.s32 64, 64
      %15 = vsyncadd [#allocation3], %s14
      %s17 = sshll.u32 [#allocation2], 4
      %s18 = int_to_ptr.vmem [resolvable:$true] %s17
      %20 = dma.hbm_to_vmem [thread:$0]  %s0, 64, %s18, [#allocation3]
    $region5: #{tpu_custom_call.1} parent=1 // pred_fallthru
      _
    // Predicated region
    $region6: #{tpu_custom_call.1} parent=1 // pred_check
      _
    $region7: #{tpu_custom_call.1} parent=1 // pred_check_branch
      %22 = sbr.rel (0) target = $region9
    $region8: #{tpu_custom_call.1} parent=1 // pred_region
      %s24 = ssub.s32 640, 640
      %25 = vsyncadd [#allocation6], %s24
      %s26 = sshll.u32 [#allocation5], 4
      %s27 = int_to_ptr.vmem [resolvable:$true] %s26
      %32 = dma.hbm_to_vmem [thread:$0]  %s1, 640, %s27, [#allocation6], 128, 128, 8
    $region9: #{tpu_custom_call.1} parent=1 // pred_fallthru
      _
    // Predicated region
    $region10: #{tpu_custom_call.1} parent=1 // pred_check
      _
    $region11: #{tpu_custom_call.1} parent=1 // pred_check_branch
      %34 = sbr.rel (0) target = $region13
    $region12: #{tpu_custom_call.1} parent=1 // pred_region
      _
    $region13: #{tpu_custom_call.1} parent=1 // pred_fallthru
      _
    // Predicated region
    $region14: #{tpu_custom_call.1} parent=1 // pred_check
      _
    $region15: #{tpu_custom_call.1} parent=1 // pred_check_branch
      %36 = sbr.rel (0) target = $region17
    $region16: #{tpu_custom_call.1} parent=1 // pred_region
      %37 = dma.done [#allocation3], 64
    $region17: #{tpu_custom_call.1} parent=1 // pred_fallthru
      _
    // Predicated region
    $region18: #{tpu_custom_call.1} parent=1 // pred_check
      _
    $region19: #{tpu_custom_call.1} parent=1 // pred_check_branch
      %39 = sbr.rel (0) target = $region21
    $region20: #{tpu_custom_call.1} parent=1 // pred_region
      %40 = dma.done [#allocation6], 640
    $region21: #{tpu_custom_call.1} parent=1 // pred_fallthru
      _
    %v41 = vld [vmem:[#allocation2] sm:$0xf]
    %v42 = vld [vmem:[#allocation5] sm:$0xff]
    %v43 = vld [vmem:[#allocation5 + $0x8] sm:$0xff]
    %v44 = vld [vmem:[#allocation5 + $0x10] sm:$0xff]
    %v45 = vld [vmem:[#allocation5 + $0x18] sm:$0xff]
    %v46 = vld [vmem:[#allocation5 + $0x20] sm:$0xf]
    %v47 = vld [vmem:[%s2] sm:$0x1]
    %v49 = vlaneseq
    %v50 = vshrl.u32 %v49, 7
    %v51 = vsub.s32 0, %v50
    %v52 = vrot.slane %v47, %v51
    %vm54 = vcmask 293888
    %v56 = vsel %vm54, %v41, 0
    %vm58 = vcmask 1043456
    %v60 = vsel %vm58, %v46, 0
    %62 = vmatprep.subr.mxu0 0.0
    %63 = vmatpush1.msra.mxu0 0.0
    %64 = vmatprep.subr.mxu0 0.0
    %65 = vmatpush1.msra.mxu0 0.0
    %66 = vmatprep.subr.mxu0 0.0
    %67 = vmatpush1.msra.mxu0 0.0
    %68 = vmatprep.subr.mxu0 0.0
    %69 = vmatpush1.msra.mxu0 0.0
    %70 = vmatprep.subr.mxu0 0.0
    %71 = vmatpush1.msra.mxu0 0.0
    %72 = vmatprep.subr.mxu0 0.0
    %73 = vmatpush1.msra.mxu0 0.0
    %74 = vmatprep.subr.mxu0 0.0
    %75 = vmatpush1.msra.mxu0 0.0
    %76 = vmatprep.subr.mxu0 0.0
    %77 = vmatpush1.msra.mxu0 0.0
    %78 = vmatprep.subr.mxu0 0.0
    %79 = vmatpush1.msra.mxu0 0.0
    %80 = vmatprep.subr.mxu0 0.0
    %81 = vmatpush1.msra.mxu0 0.0
    %82 = vmatprep.subr.mxu0 0.0
    %83 = vmatpush1.msra.mxu0 0.0
    %84 = vmatprep.subr.mxu0 0.0
    %85 = vmatpush1.msra.mxu0 %v60
    %86 = vmatprep.subr.mxu0 0.0
    %87 = vmatpush1.msra.mxu0 %v45
    %88 = vmatprep.subr.mxu0 0.0
    %89 = vmatpush1.msra.mxu0 %v44
    %90 = vmatprep.subr.mxu0 0.0
    %91 = vmatpush1.msra.mxu0 %v43
    %92 = vmatprep.subr.mxu0 0.0
    %93 = vmatpush1.msra.mxu0 %v42
    %94 = vmatprep.subr.mxu0 0.0
    %95 = vmatpush2.msra.mxu0 0.0
    %96 = vmatprep.subr.mxu0 0.0
    %97 = vmatpush2.msra.mxu0 0.0
    %98 = vmatprep.subr.mxu0 0.0
    %99 = vmatpush2.msra.mxu0 0.0
    %100 = vmatprep.subr.mxu0 0.0
    %101 = vmatpush2.msra.mxu0 0.0
    %102 = vmatprep.subr.mxu0 0.0
    %103 = vmatpush2.msra.mxu0 0.0
    %104 = vmatprep.subr.mxu0 0.0
    %105 = vmatpush2.msra.mxu0 0.0
    %106 = vmatprep.subr.mxu0 0.0
    %107 = vmatpush2.msra.mxu0 0.0
    %108 = vmatprep.subr.mxu0 0.0
    %109 = vmatpush2.msra.mxu0 0.0
    %110 = vmatprep.subr.mxu0 0.0
    %111 = vmatpush2.msra.mxu0 0.0
    %112 = vmatprep.subr.mxu0 0.0
    %113 = vmatpush2.msra.mxu0 0.0
    %114 = vmatprep.subr.mxu0 0.0
    %115 = vmatpush2.msra.mxu0 0.0
    %116 = vmatprep.subr.mxu0 0.0
    %117 = vmatpush2.msra.mxu0 0.0
    %118 = vmatprep.subr.mxu0 0.0
    %119 = vmatpush2.msra.mxu0 0.0
    %120 = vmatprep.subr.mxu0 0.0
    %121 = vmatpush2.msra.mxu0 0.0
    %122 = vmatprep.subr.mxu0 0.0
    %123 = vmatpush2.msra.mxu0 0.0
    %124 = vmatprep.subr.mxu0 0.0
    %125 = vmatpush2.msra.mxu0 0.0
    %126 = vmatprep.mubr.f32.mxu0 0.0
    %127 = vmatmul.mubr.f32.gmra.mxu0 %v56
    %v128 = vpop.f32.mrf.mxu0
    %v129 = vadd.f32 %v52, %v128
    %v130 = vpop.f32.mrf.mxu0
    %131 = vdwg.mxu0
    %132 = vst [vmem:[#allocation7] sm:$0xf] %v129
    // Predicated region
    $region22: #{tpu_custom_call.1} parent=1 // pred_check
      _
    $region23: #{tpu_custom_call.1} parent=1 // pred_check_branch
      %134 = sbr.rel (0) target = $region25
    $region24: #{tpu_custom_call.1} parent=1 // pred_region
      %s136 = ssub.s32 64, 64
      %137 = vsyncadd [#allocation4], %s136
      %s139 = sshll.u32 [#allocation7], 4
      %s140 = int_to_ptr.vmem [resolvable:$true] %s139
      %142 = dma.vmem_to_hbm [thread:$0]  %s140, 64, %s3, [#allocation4]
    $region25: #{tpu_custom_call.1} parent=1 // pred_fallthru
      _
    // Predicated region
    $region26: #{tpu_custom_call.1} parent=1 // pred_check
      _
    $region27: #{tpu_custom_call.1} parent=1 // pred_check_branch
      %144 = sbr.rel (0) target = $region29
    $region28: #{tpu_custom_call.1} parent=1 // pred_region
      %145 = dma.done [#allocation4], 64
    $region29: #{tpu_custom_call.1} parent=1 // pred_fallthru
      _
    %146 = vsyncpa [#allocation3], 1
    %147 = vsyncpa [#allocation6], 1
    %148 = vsyncpa [#allocation4], 1

</llo_original>
